<compile_context>
chip_gen: v5e
topology: v5e:2x2
jax: 0.10.0
libtpu: 0.0.40
codegen_flags: <defaults>
</compile_context>

<pallas_src>
import jax
import jax.numpy as jnp
from jax import lax
from jax.experimental import pallas as pl
from jax.experimental.pallas import tpu as pltpu


def linear_add_kernel(x1_ref, w_ref, b_ref, x2_ref, o_ref):
    # x1: (B, IN), w: (OUT, IN)  -> contract IN (dim 1 of both) on the MXU
    acc = lax.dot_general(
        x1_ref[...], w_ref[...],
        dimension_numbers=(((1,), (1,)), ((), ())),
        preferred_element_type=jnp.float32,
    )                                            # (B, OUT), f32 accumulation
    o_ref[...] = (acc + b_ref[...] + x2_ref[...]).astype(o_ref.dtype)


def linear_add(x1, w, b, x2):
    """x1: (B, IN), w: (OUT, IN) [PyTorch convention], b: (OUT,), x2: (B, OUT)."""
    B, IN = x1.shape
    OUT = w.shape[0]
    b2 = b.reshape(1, OUT)  # 2-D, lane-major bias

    vmem_spec = pl.BlockSpec(memory_space=pltpu.MemorySpace.VMEM)
    return pl.pallas_call(
        linear_add_kernel,
        out_shape=jax.ShapeDtypeStruct((B, OUT), x1.dtype),
        in_specs=[vmem_spec, vmem_spec, vmem_spec, vmem_spec],
        out_specs=vmem_spec,
    )(x1, w, b2, x2)


if __name__ == "__main__":
    key = jax.random.PRNGKey(0)
    k1, k2, kw, kb = jax.random.split(key, 4)

    B, IN, OUT = 2, 8, 16
    x1 = jax.random.normal(k1, (B, IN), dtype=jnp.float32)
    x2 = jax.random.normal(k2, (B, OUT), dtype=jnp.float32)

    # Deterministic parameter init (PyTorch Linear-style uniform bound 1/sqrt(IN))
    bound = 1.0 / (IN ** 0.5)
    w = jax.random.uniform(kw, (OUT, IN), minval=-bound, maxval=bound,
                           dtype=jnp.float32)
    b = jax.random.uniform(kb, (OUT,), minval=-bound, maxval=bound,
                           dtype=jnp.float32)

    out = linear_add(x1, w, b, x2)
    out = jax.block_until_ready(out)

    # Reference check in plain JAX
    ref = x1 @ w.T + b + x2
    assert out.shape == (B, OUT)
    assert jnp.allclose(out, ref, atol=1e-5, rtol=1e-5)

    print("KERNEL_OK")
</pallas_src>

<mosaic_0001>
module attributes {stable_mosaic.version = 11 : i64} {
  func.func @linear_add_kernel(%arg0: memref<2x8xf32, #tpu.memory_space<vmem>>, %arg1: memref<16x8xf32, #tpu.memory_space<vmem>>, %arg2: memref<1x16xf32, #tpu.memory_space<vmem>>, %arg3: memref<2x16xf32, #tpu.memory_space<vmem>>, %arg4: memref<2x16xf32, #tpu.memory_space<vmem>>) attributes {dimension_semantics = [], scalar_prefetch = 0 : i64, scratch_operands = 0 : i64, tpu.core_type = #tpu.core_type<tc>} {
    %c0 = arith.constant 0 : index
    %c0_0 = arith.constant 0 : index
    %0 = vector.load %arg0[%c0, %c0_0] : memref<2x8xf32, #tpu.memory_space<vmem>>, vector<2x8xf32>
    %c0_1 = arith.constant 0 : index
    %c0_2 = arith.constant 0 : index
    %1 = vector.load %arg1[%c0_1, %c0_2] : memref<16x8xf32, #tpu.memory_space<vmem>>, vector<16x8xf32>
    %cst = arith.constant dense<0.000000e+00> : vector<2x16xf32>
    %2 = tpu.matmul %0, %1, %cst {dimension_numbers = #tpu.dot_dimension_numbers<[1], [1], [0], [0], [0, 0, 1, 0], [], []>} : vector<2x8xf32>, vector<16x8xf32>, vector<2x16xf32> -> vector<2x16xf32>
    %c0_3 = arith.constant 0 : index
    %c0_4 = arith.constant 0 : index
    %3 = vector.load %arg2[%c0_3, %c0_4] : memref<1x16xf32, #tpu.memory_space<vmem>>, vector<1x16xf32>
    %4 = vector.broadcast %3 : vector<1x16xf32> to vector<2x16xf32>
    %5 = arith.addf %2, %4 : vector<2x16xf32>
    %c0_5 = arith.constant 0 : index
    %c0_6 = arith.constant 0 : index
    %6 = vector.load %arg3[%c0_5, %c0_6] : memref<2x16xf32, #tpu.memory_space<vmem>>, vector<2x16xf32>
    %7 = arith.addf %5, %6 : vector<2x16xf32>
    %c0_7 = arith.constant 0 : index
    %c0_8 = arith.constant 0 : index
    %8 = vector.load %arg4[%c0_7, %c0_8] : memref<2x16xf32, #tpu.memory_space<vmem>>, vector<2x16xf32>
    tpu.vector_store %arg4[%c0_7, %c0_8], %7 {strides = array<i32>} : memref<2x16xf32, #tpu.memory_space<vmem>>, vector<2x16xf32>,
    return
  }
}

</mosaic_0001>

<llo_original>
// kernel: tpu_custom_call.1
$region0: #{tpu_custom_call.1}
  #allocation0 [shape = 'u32[]', space=smem, size = 0x4, offset = 0x4, fixed_abs, tag = 'smem constant byte address 0x4 - core index']
  #allocation1 [shape = 'u32[72,128]{1,0:T(1,128)}', space=vmem, size = 0x9000, scoped, tag = 'internal scratch']
  %s0 = inlined_call_operand.vmem [shape: f32[2,8], index: 0, kind: input, shape index: {}]
  %s1 = inlined_call_operand.vmem [shape: f32[16,8], index: 1, kind: input, shape index: {}]
  %s2 = inlined_call_operand.vmem [shape: f32[1,16], index: 2, kind: input, shape index: {}]
  %s3 = inlined_call_operand.vmem [shape: f32[2,16], index: 3, kind: input, shape index: {}]
  %s4 = inlined_call_operand.hbm [shape: f32[2,16], index: 4, kind: output, shape index: {}]
  %s5 = sld [smem:[#allocation0]]
  $region26: #{tpu_custom_call.1} parent=0
    _
  %s7 = ssub.s32 1, %s5
  %s8 = scalar_select 0, %s7, %s5
  $region1: #{tpu_custom_call.1} parent=0
    #allocation2 [shape = 'u8[1024]{0}', space=vmem, size = 0x400, scoped, tag = 'output window, operand 0, single buffered']
    #allocation3 [shape = 's32[1]{0}', space=sflag, size = 0x4, scoped, tag = 'scoped memory for tpu_custom_call.1']
    %9 = vsyncpa [#allocation3], 0
    // Predicated region
    $region2: #{tpu_custom_call.1} parent=1 // pred_check
      _
    $region3: #{tpu_custom_call.1} parent=1 // pred_check_branch
      %11 = sbr.rel (0) target = $region5
    $region4: #{tpu_custom_call.1} parent=1 // pred_region
      _
    $region5: #{tpu_custom_call.1} parent=1 // pred_fallthru
      _
    // Predicated region
    $region6: #{tpu_custom_call.1} parent=1 // pred_check
      _
    $region7: #{tpu_custom_call.1} parent=1 // pred_check_branch
      %13 = sbr.rel (0) target = $region9
    $region8: #{tpu_custom_call.1} parent=1 // pred_region
      _
    $region9: #{tpu_custom_call.1} parent=1 // pred_fallthru
      _
    // Predicated region
    $region10: #{tpu_custom_call.1} parent=1 // pred_check
      _
    $region11: #{tpu_custom_call.1} parent=1 // pred_check_branch
      %15 = sbr.rel (0) target = $region13
    $region12: #{tpu_custom_call.1} parent=1 // pred_region
      _
    $region13: #{tpu_custom_call.1} parent=1 // pred_fallthru
      _
    // Predicated region
    $region14: #{tpu_custom_call.1} parent=1 // pred_check
      _
    $region15: #{tpu_custom_call.1} parent=1 // pred_check_branch
      %17 = sbr.rel (0) target = $region17
    $region16: #{tpu_custom_call.1} parent=1 // pred_region
      _
    $region17: #{tpu_custom_call.1} parent=1 // pred_fallthru
      _
    %v18 = vld [vmem:[%s0] sm:$0x3]
    %v19 = vld [vmem:[%s1] sm:$0xff]
    %v20 = vld [vmem:[%s1 + $0x8] sm:$0xff]
    %v21 = vld [vmem:[%s2] sm:$0x1]
    %v23 = vperm.slane %v21, 0
    %vm25 = vcmask 64512
    %v27 = vsel %vm25, %v18, 0
    %v30 = vsel %vm25, %v19, 0
    %v33 = vsel %vm25, %v20, 0
    %35 = vmatpush.xpose.msra.mxu0 0.0
    %36 = vmatpush.xpose.msra.mxu0 0.0
    %37 = vmatpush.xpose.msra.mxu0 0.0
    %38 = vmatpush.xpose.msra.mxu0 0.0
    %39 = vmatpush.xpose.msra.mxu0 0.0
    %40 = vmatpush.xpose.msra.mxu0 0.0
    %41 = vmatpush.xpose.msra.mxu0 0.0
    %42 = vmatpush.xpose.msra.mxu0 0.0
    %43 = vmatpush.xpose.msra.mxu0 0.0
    %44 = vmatpush.xpose.msra.mxu0 0.0
    %45 = vmatpush.xpose.msra.mxu0 0.0
    %46 = vmatpush.xpose.msra.mxu0 0.0
    %47 = vmatpush.xpose.msra.mxu0 0.0
    %48 = vmatpush.xpose.msra.mxu0 0.0
    %49 = vmatpush.xpose.msra.mxu0 %v33
    %50 = vmatpush.xpose.msra.mxu0 %v30
    %51 = vmatmul.f32.gmra.mxu0 %v27
    %v52 = vpop.f32.mrf.mxu0
    %v53 = vadd.f32 %v23, %v52
    %54 = vdwg.mxu0
    %v55 = vld [vmem:[%s3] sm:$0x3]
    %v56 = vadd.f32 %v53, %v55
    %vm57 = vcmask 123904
    %58 = vst.msk [vmem:[#allocation2] sm:$0x3] %vm57, %v56
    // Predicated region
    $region18: #{tpu_custom_call.1} parent=1 // pred_check
      _
    $region19: #{tpu_custom_call.1} parent=1 // pred_check_branch
      %60 = sbr.rel (0) target = $region21
    $region20: #{tpu_custom_call.1} parent=1 // pred_region
      %62 = vsyncadd [#allocation3], 0
      %s64 = sshll.u32 [#allocation2], 4
      %s65 = int_to_ptr.vmem [resolvable:$true] %s64
      %s66 = sshll.u32 %s4, 4
      %s67 = int_to_ptr.hbm [resolvable:$true] %s66
      %69 = dma.vmem_to_hbm [thread:$0]  %s65, 32, %s67, [#allocation3]
    $region21: #{tpu_custom_call.1} parent=1 // pred_fallthru
      _
    // Predicated region
    $region22: #{tpu_custom_call.1} parent=1 // pred_check
      _
    $region23: #{tpu_custom_call.1} parent=1 // pred_check_branch
      %71 = sbr.rel (0) target = $region25
    $region24: #{tpu_custom_call.1} parent=1 // pred_region
      %73 = dma.done [#allocation3], 32
    $region25: #{tpu_custom_call.1} parent=1 // pred_fallthru
      _
    %74 = vsyncpa [#allocation3], 1

</llo_original>
